<compile_context>
chip_gen: v6e
topology: v6e:2x2x1
jax: 0.10.0
libtpu: 0.0.40
codegen_flags: <defaults>
</compile_context>

<pallas_src>
import math
from typing import NamedTuple, Optional

import jax
import jax.numpy as jnp
from jax.experimental import pallas as pl
from jax.experimental.pallas import tpu as pltpu


def _round_up(x, m):
    return ((x + m - 1) // m) * m


def _device_defaults():
    """Per-TPU-generation tile preferences and VMEM budgets (bytes)."""
    kind = ""
    try:
        kind = jax.devices()[0].device_kind.lower()
    except Exception:
        pass
    if "v5 lite" in kind or "v5e" in kind or "v5lite" in kind:
        # v5e ridge ~240 FLOP/byte: 512x512 output tiles already saturate the MXU.
        return dict(tm=512, tn=512, tk=1024, budget=80 << 20, limit=110 << 20)
    if "v6" in kind:
        # v6e ridge ~650 FLOP/byte: big output tiles, 128 MiB VMEM available.
        return dict(tm=1024, tn=1024, tk=2048, budget=96 << 20, limit=116 << 20)
    if "v4" in kind or "v5p" in kind or "v5" in kind:
        return dict(tm=512, tn=1024, tk=2048, budget=80 << 20, limit=110 << 20)
    # v7x / unknown: 64 MiB VMEM per TensorCore -> keep footprint well under.
    return dict(tm=512, tn=1024, tk=2048, budget=44 << 20, limit=56 << 20)


def _pick_tile(dim, preferred, align, max_waste_frac=0.125):
    """Pad-to-tile tile picker.

    Returns the largest multiple of `align` <= `preferred` whose pad-to-tile
    waste (round_up(dim, tile) - dim) is bounded; the caller pads `dim` up to a
    multiple of the returned tile.  Never collapses to tiny tiles on near-prime
    dims (unlike a shrink-to-divisor policy)."""
    dim = _round_up(max(int(dim), 1), align)
    if dim <= preferred:
        return dim                                # single block, zero waste
    preferred = max(align, (int(preferred) // align) * align)
    max_waste = max(align, int(dim * max_waste_frac))
    for t in range(preferred, align - 1, -align):
        if _round_up(dim, t) - dim <= max_waste:
            return t
    return align


class RowParallelParams(NamedTuple):
    w_kn: jax.Array        # (Kp, Np) pre-transposed, pad-to-tile weight
    bias2d: jax.Array      # (1, Np) f32 bias (zeros if the module has no bias)
    out_features: int      # N (unpadded)
    in_features: int       # K (unpadded)
    tn: int                # N tile chosen at prep time (divides Np)
    tk: int                # K tile chosen at prep time (divides Kp)


def prepare_row_parallel_params(weight, bias=None, *, params_dtype=None,
                                tn=None, tk=None):
    """One-time (init-side) parameter prep.  Do NOT call per forward pass.

    * transposes the torch-layout (N, K) weight to (K, N) for the MXU,
    * zero-pads K and N up to a multiple of the chosen tiles,
    * keeps the bias in f32 (it feeds the f32 accumulator / epilogue directly),
    * optionally casts the weight to `params_dtype` -- bf16 strongly
      recommended on v5e/v6e/v7x (bf16-native MXU, half the HBM bytes/tile).
    """
    N, K = weight.shape
    d = _device_defaults()
    if tn is None:
        tn = _pick_tile(N, d["tn"], 128)
    if tk is None:
        tk = _pick_tile(K, d["tk"], 128)
    Np = _round_up(N, tn)
    Kp = _round_up(K, tk)

    w_kn = jnp.asarray(weight).T                        # (K, N) -- done once
    if params_dtype is not None:
        w_kn = w_kn.astype(params_dtype)
    if (Kp, Np) != (K, N):
        w_kn = jnp.pad(w_kn, ((0, Kp - K), (0, Np - N)))

    if bias is None:
        b2d = jnp.zeros((1, Np), jnp.float32)
    else:
        b2d = jnp.asarray(bias, jnp.float32).reshape(1, N)
        if Np != N:
            b2d = jnp.pad(b2d, ((0, 0), (0, Np - N)))

    return RowParallelParams(w_kn, b2d, int(N), int(K), int(tn), int(tk))


# --------------------------- kernels ---------------------------------------

def _rpl_fullk_kernel(x_ref, w_ref, b_ref, o_ref):
    """Weight-resident path: one MXU pass over the whole K for this tile.

    Grid is (N blocks, M blocks) with N outermost, so the (Kp, tn) weight strip
    keeps the same block index across the inner M loop and is not re-fetched.
    No f32 accumulator scratch -- the output tile is written exactly once."""
    acc = jnp.dot(x_ref[...].astype(w_ref.dtype), w_ref[...],
                  preferred_element_type=jnp.float32)
    o_ref[...] = (acc + b_ref[...]).astype(o_ref.dtype)


def _rpl_kgrid_kernel(x_ref, w_ref, b_ref, o_ref, acc_ref):
    """Output-stationary (tm, tn) tile; K is the innermost reduction axis."""
    k = pl.program_id(2)

    @pl.when(k == 0)
    def _():
        # Fold the (f32) bias add into the accumulator init.
        acc_ref[...] = jnp.broadcast_to(b_ref[...], acc_ref.shape)

    acc_ref[...] += jnp.dot(x_ref[...].astype(w_ref.dtype), w_ref[...],
                            preferred_element_type=jnp.float32)

    @pl.when(k == pl.num_programs(2) - 1)
    def _():
        o_ref[...] = acc_ref[...].astype(o_ref.dtype)


# --------------------------- forward wrapper --------------------------------

def row_parallel_linear(x, params: RowParallelParams, *, tm=None,
                        force_path: Optional[str] = None):
    """Forward of RowParallelLinear (world_size=1, skip_bias_add=False).

    x: (..., K);  params: from prepare_row_parallel_params.
    Returns (output, output_bias=None) matching the PyTorch module."""
    *lead, K = x.shape
    if K != params.in_features:
        raise ValueError(f"x last dim {K} != weight in_features {params.in_features}")
    w_kn, b2d = params.w_kn, params.bias2d
    Kp, Np = w_kn.shape
    tn, tk = params.tn, params.tk
    N = params.out_features
    M = int(math.prod(lead)) if lead else 1
    out_dtype = x.dtype

    d = _device_defaults()
    tm = _pick_tile(M, d["tm"] if tm is None else tm, 8)
    Mp = _round_up(M, tm)

    # Small-M (decode-like): modest N tiles -> many parallel N blocks so the
    # weight stream can be split across TensorCores; smaller W strips in VMEM.
    if Mp <= 256 and tn > 512 and tn % 512 == 0:
        tn = 512
    # Avoid a degenerate single-output-block grid (would idle one v7x core).
    if Mp == tm and Np == tn and tn % 256 == 0:
        tn //= 2

    x2d = x.reshape(M, K)
    if (Mp, Kp) != (M, K):
        # Zero padding is exact for the matmul; pad rows/cols are sliced off below.
        x2d = jnp.pad(x2d, ((0, Mp - M), (0, Kp - K)))
    # NOTE: any dtype cast of x (e.g. f32 activations with bf16 weights) happens
    # inside the kernel on the VPU -> no extra full-HBM cast pass here.

    x_item = x2d.dtype.itemsize
    w_item = w_kn.dtype.itemsize
    o_item = jnp.dtype(out_dtype).itemsize
    budget, limit = d["budget"], d["limit"]

    n_ksteps = Kp // tk
    # Double-buffered footprint of the weight-resident (full-K) path.
    fullk_fp = 2 * (tm * Kp * x_item + Kp * tn * w_item + tn * 4 + tm * tn * o_item)
    use_fullk = force_path != "kgrid" and (
        force_path == "fullk" or n_ksteps == 1 or fullk_fp + (4 << 20) <= budget)

    if use_fullk:
        grid = (Np // tn, Mp // tm)        # N outermost: W strip resident over i
        vmem_limit = int(min(limit, max(32 << 20, fullk_fp + (8 << 20))))
        out2d = pl.pallas_call(
            _rpl_fullk_kernel,
            out_shape=jax.ShapeDtypeStruct((Mp, Np), out_dtype),
            grid_spec=pltpu.PrefetchScalarGridSpec(
                num_scalar_prefetch=0,
                grid=grid,
                in_specs=[
                    pl.BlockSpec((tm, Kp), lambda j, i: (i, 0)),   # X strip
                    # TODO(synk): pl.Buffered(3) on the W spec could further hide
                    # DMA latency at small M (weight-HBM-bound decode shapes).
                    pl.BlockSpec((Kp, tn), lambda j, i: (0, j)),   # W strip (resident)
                    pl.BlockSpec((1, tn), lambda j, i: (0, j)),    # f32 bias tile
                ],
                out_specs=pl.BlockSpec((tm, tn), lambda j, i: (i, j)),
            ),
            compiler_params=pltpu.CompilerParams(
                dimension_semantics=("parallel", "parallel"),
                vmem_limit_bytes=vmem_limit,
            ),
        )(x2d, w_kn, b2d)
    else:
        grid = (Mp // tm, Np // tn, n_ksteps)
        kgrid_fp = (2 * (tm * tk * x_item + tk * tn * w_item + tn * 4
                         + tm * tn * o_item) + tm * tn * 4)
        vmem_limit = int(min(limit, max(32 << 20, kgrid_fp + (8 << 20))))
        out2d = pl.pallas_call(
            _rpl_kgrid_kernel,
            out_shape=jax.ShapeDtypeStruct((Mp, Np), out_dtype),
            grid_spec=pltpu.PrefetchScalarGridSpec(
                num_scalar_prefetch=0,
                grid=grid,
                in_specs=[
                    pl.BlockSpec((tm, tk), lambda i, j, k: (i, k)),   # X tile
                    pl.BlockSpec((tk, tn), lambda i, j, k: (k, j)),   # W (K,N) tile
                    pl.BlockSpec((1, tn), lambda i, j, k: (0, j)),    # f32 bias tile
                ],
                out_specs=pl.BlockSpec((tm, tn), lambda i, j, k: (i, j)),
                scratch_shapes=[pltpu.VMEM((tm, tn), jnp.float32)],
            ),
            compiler_params=pltpu.CompilerParams(
                dimension_semantics=("parallel", "parallel", "arbitrary"),
                vmem_limit_bytes=vmem_limit,
            ),
        )(x2d, w_kn, b2d)

    out2d = out2d[:M, :N]                 # drop pad rows / pad columns
    output = out2d.reshape(*lead, N)
    return output, None    # skip_bias_add=False -> bias already added, return None


def xavier_normal_init(key, out_size, in_size, dtype=jnp.float32):
    """Matches torch.nn.init.xavier_normal_ on an (out_size, in_size) matrix."""
    std = math.sqrt(2.0 / (in_size + out_size))
    return (jax.random.normal(key, (out_size, in_size), jnp.float32) * std).astype(dtype)


if __name__ == "__main__":
    key = jax.random.PRNGKey(0)
    k1, k2, k3, k4 = jax.random.split(key, 4)

    # ---- test 1: small aligned problem, f32 operands (full-K path) ----
    batch, seq, input_size, output_size = 2, 8, 256, 128
    x = jax.random.normal(k1, (batch, seq, input_size), jnp.float32)
    weight = xavier_normal_init(k2, output_size, input_size)   # (N, K) torch layout
    bias = jnp.zeros((output_size,), jnp.float32)              # module does bias.zero_()

    params = prepare_row_parallel_params(weight, bias)
    out, out_bias = row_parallel_linear(x, params)
    out = jax.block_until_ready(out)
    ref = x @ weight.T + bias
    assert out.shape == (batch, seq, output_size)
    assert out_bias is None
    assert jnp.allclose(out, ref, rtol=1e-5, atol=1e-5)

    # ---- test 2: non-aligned shapes exercise the pad-to-tile path (f32) ----
    b2, s2, in2, out2sz = 3, 7, 200, 100
    x2 = jax.random.normal(k3, (b2, s2, in2), jnp.float32)
    w2 = xavier_normal_init(k4, out2sz, in2)
    bias2 = jax.random.normal(jax.random.PRNGKey(1), (out2sz,), jnp.float32) * 0.1
    params2 = prepare_row_parallel_params(w2, bias2)
    out2, _ = row_parallel_linear(x2, params2)
    out2 = jax.block_until_ready(out2)
    ref2 = x2 @ w2.T + bias2
    assert out2.shape == (b2, s2, out2sz)
    assert jnp.allclose(out2, ref2, rtol=1e-4, atol=1e-4)

    # ---- test 3: bf16 operands (recommended path), f32 accumulation ----
    params_bf = prepare_row_parallel_params(weight, bias, params_dtype=jnp.bfloat16)
    out_bf, _ = row_parallel_linear(x.astype(jnp.bfloat16), params_bf)
    out_bf = jax.block_until_ready(out_bf)
    assert jnp.allclose(out_bf.astype(jnp.float32), ref, rtol=5e-2, atol=5e-2)

    # ---- test 4: force the K-grid accumulator path (multi-step reduction) ----
    params_k = prepare_row_parallel_params(weight, bias, tk=128)   # Kp=256 -> 2 K steps
    out_k, _ = row_parallel_linear(x, params_k, force_path="kgrid")
    out_k = jax.block_until_ready(out_k)
    assert jnp.allclose(out_k, ref, rtol=1e-5, atol=1e-5)

    # ---- test 5: mixed dtype (f32 activations, bf16 weights) -> in-kernel cast ----
    out_mix, _ = row_parallel_linear(x, params_bf)
    out_mix = jax.block_until_ready(out_mix)
    assert jnp.allclose(out_mix, ref, rtol=5e-2, atol=5e-2)

    print("KERNEL_OK")
</pallas_src>

<mosaic_0001>
module attributes {stable_mosaic.version = 11 : i64} {
  func.func @_rpl_fullk_kernel(%arg0: i32, %arg1: i32, %arg2: memref<16x256xf32, #tpu.memory_space<vmem>>, %arg3: memref<256x128xf32, #tpu.memory_space<vmem>>, %arg4: memref<1x128xf32, #tpu.memory_space<vmem>>, %arg5: memref<16x128xf32, #tpu.memory_space<vmem>>) attributes {dimension_semantics = [#tpu.dimension_semantics<parallel>, #tpu.dimension_semantics<parallel>], iteration_bounds = array<i64: 1, 1>, scalar_prefetch = 0 : i64, scratch_operands = 0 : i64, tpu.core_type = #tpu.core_type<tc>, window_params = [{transform_indices = @transform_0, window_bounds = array<i64: 16, 256>}, {transform_indices = @transform_1, window_bounds = array<i64: 256, 128>}, {transform_indices = @transform_2, window_bounds = array<i64: 1, 128>}, {transform_indices = @transform_3, window_bounds = array<i64: 16, 128>}]} {
    %c0 = arith.constant 0 : index
    %c0_0 = arith.constant 0 : index
    %0 = vector.load %arg2[%c0, %c0_0] : memref<16x256xf32, #tpu.memory_space<vmem>>, vector<16x256xf32>
    %c0_1 = arith.constant 0 : index
    %c0_2 = arith.constant 0 : index
    %1 = vector.load %arg3[%c0_1, %c0_2] : memref<256x128xf32, #tpu.memory_space<vmem>>, vector<256x128xf32>
    %cst = arith.constant dense<0.000000e+00> : vector<16x128xf32>
    %2 = tpu.matmul %0, %1, %cst {dimension_numbers = #tpu.dot_dimension_numbers<[1], [0], [0], [1], [0, 0, 1, 1], [], []>} : vector<16x256xf32>, vector<256x128xf32>, vector<16x128xf32> -> vector<16x128xf32>
    %c0_3 = arith.constant 0 : index
    %c0_4 = arith.constant 0 : index
    %3 = vector.load %arg4[%c0_3, %c0_4] : memref<1x128xf32, #tpu.memory_space<vmem>>, vector<1x128xf32>
    %4 = vector.broadcast %3 : vector<1x128xf32> to vector<16x128xf32>
    %5 = arith.addf %2, %4 : vector<16x128xf32>
    %c0_5 = arith.constant 0 : index
    %c0_6 = arith.constant 0 : index
    %6 = vector.load %arg5[%c0_5, %c0_6] : memref<16x128xf32, #tpu.memory_space<vmem>>, vector<16x128xf32>
    tpu.vector_store %arg5[%c0_5, %c0_6], %5 {strides = array<i32>} : memref<16x128xf32, #tpu.memory_space<vmem>>, vector<16x128xf32>,
    return
  }
  func.func @transform_0(%arg0: i32, %arg1: i32) -> (i32, i32) {
    %c0_i32 = arith.constant 0 : i32
    %c0_i32_0 = arith.constant 0 : i32
    return %arg1, %c0_i32 : i32, i32
  }
  func.func @transform_1(%arg0: i32, %arg1: i32) -> (i32, i32) {
    %c0_i32 = arith.constant 0 : i32
    %c0_i32_0 = arith.constant 0 : i32
    return %c0_i32, %arg0 : i32, i32
  }
  func.func @transform_2(%arg0: i32, %arg1: i32) -> (i32, i32) {
    %c0_i32 = arith.constant 0 : i32
    %c0_i32_0 = arith.constant 0 : i32
    return %c0_i32, %arg0 : i32, i32
  }
  func.func @transform_3(%arg0: i32, %arg1: i32) -> (i32, i32) {
    %c0_i32 = arith.constant 0 : i32
    return %arg1, %arg0 : i32, i32
  }
}

</mosaic_0001>

<llo_original>
// kernel: tpu_custom_call.1
$region0: #{tpu_custom_call.1}
  #allocation0 [shape = 'u32[]', space=smem, size = 0x4, offset = 0x4, fixed_abs, tag = 'smem constant byte address 0x4 - core index']
  #allocation1 [shape = 'u32[144,128]{1,0:T(1,128)}', space=vmem, size = 0x12000, scoped, tag = 'internal scratch']
  %s0 = inlined_call_operand.hbm [shape: f32[16,256], index: 0, kind: input, shape index: {}]
  %s1 = inlined_call_operand.hbm [shape: f32[256,128], index: 1, kind: input, shape index: {}]
  %s2 = inlined_call_operand.vmem [shape: f32[1,128], index: 2, kind: input, shape index: {}]
  %s3 = inlined_call_operand.hbm [shape: f32[16,128], index: 3, kind: output, shape index: {}]
  %s4 = sld [smem:[#allocation0]]
  $region30: #{tpu_custom_call.1} parent=0
    _
  %s6 = ssub.s32 1, %s4
  %s7 = scalar_select 0, %s6, %s4
  $region1: #{tpu_custom_call.1} parent=0
    #allocation2 [shape = 'u8[16384]{0}', space=vmem, size = 0x4000, scoped, tag = 'input window, operand 0, single buffered']
    #allocation3 [shape = 's32[1]{0}', space=sflag, size = 0x4, scoped, tag = 'scoped memory for tpu_custom_call.1']
    #allocation4 [shape = 's32[1]{0}', space=sflag, size = 0x4, scoped, tag = 'scoped memory for tpu_custom_call.1']
    #allocation5 [shape = 'u8[131072]{0}', space=vmem, size = 0x20000, scoped, tag = 'input window, operand 1, single buffered']
    #allocation6 [shape = 's32[1]{0}', space=sflag, size = 0x4, scoped, tag = 'scoped memory for tpu_custom_call.1']
    #allocation7 [shape = 'u8[8192]{0}', space=vmem, size = 0x2000, scoped, tag = 'output window, operand 0, single buffered']
    %8 = vsyncpa [#allocation3], 0
    %9 = vsyncpa [#allocation6], 0
    %10 = vsyncpa [#allocation4], 0
    // Predicated region
    $region2: #{tpu_custom_call.1} parent=1 // pred_check
      _
    $region3: #{tpu_custom_call.1} parent=1 // pred_check_branch
      %12 = sbr.rel (0) target = $region5
    $region4: #{tpu_custom_call.1} parent=1 // pred_region
      %s14 = ssub.s32 512, 512
      %15 = vsyncadd [#allocation3], %s14
      %s16 = sshll.u32 [#allocation2], 4
      %s17 = int_to_ptr.vmem [resolvable:$true] %s16
      %22 = dma.hbm_to_vmem [thread:$0]  %s0, 512, %s17, [#allocation3], 256, 256, 16
    $region5: #{tpu_custom_call.1} parent=1 // pred_fallthru
      _
    // Predicated region
    $region6: #{tpu_custom_call.1} parent=1 // pred_check
      _
    $region7: #{tpu_custom_call.1} parent=1 // pred_check_branch
      %24 = sbr.rel (0) target = $region9
    $region8: #{tpu_custom_call.1} parent=1 // pred_region
      %s26 = ssub.s32 4096, 4096
      %27 = vsyncadd [#allocation6], %s26
      %s28 = sshll.u32 [#allocation5], 4
      %s29 = int_to_ptr.vmem [resolvable:$true] %s28
      %34 = dma.hbm_to_vmem [thread:$0]  %s1, 4096, %s29, [#allocation6], 128, 128, 8
    $region9: #{tpu_custom_call.1} parent=1 // pred_fallthru
      _
    // Predicated region
    $region10: #{tpu_custom_call.1} parent=1 // pred_check
      _
    $region11: #{tpu_custom_call.1} parent=1 // pred_check_branch
      %36 = sbr.rel (0) target = $region13
    $region12: #{tpu_custom_call.1} parent=1 // pred_region
      _
    $region13: #{tpu_custom_call.1} parent=1 // pred_fallthru
      _
    // Predicated region
    $region14: #{tpu_custom_call.1} parent=1 // pred_check
      _
    $region15: #{tpu_custom_call.1} parent=1 // pred_check_branch
      %38 = sbr.rel (0) target = $region17
    $region16: #{tpu_custom_call.1} parent=1 // pred_region
      %39 = dma.done [#allocation3], 512
    $region17: #{tpu_custom_call.1} parent=1 // pred_fallthru
      _
    // Predicated region
    $region18: #{tpu_custom_call.1} parent=1 // pred_check
      _
    $region19: #{tpu_custom_call.1} parent=1 // pred_check_branch
      %41 = sbr.rel (0) target = $region21
    $region20: #{tpu_custom_call.1} parent=1 // pred_region
      %42 = dma.done [#allocation6], 4096
    $region21: #{tpu_custom_call.1} parent=1 // pred_fallthru
      _
    %v43 = vld [vmem:[#allocation2] sm:$0xff]
    %v44 = vld [vmem:[#allocation2 + $0x8] sm:$0xff]
    %v45 = vld [vmem:[#allocation2 + $0x10] sm:$0xff]
    %v46 = vld [vmem:[#allocation2 + $0x18] sm:$0xff]
    %v47 = vld [vmem:[#allocation5] sm:$0xff]
    %v48 = vld [vmem:[#allocation5 + $0x8] sm:$0xff]
    %v49 = vld [vmem:[#allocation5 + $0x10] sm:$0xff]
    %v50 = vld [vmem:[#allocation5 + $0x18] sm:$0xff]
    %v51 = vld [vmem:[#allocation5 + $0x20] sm:$0xff]
    %v52 = vld [vmem:[#allocation5 + $0x28] sm:$0xff]
    %v53 = vld [vmem:[#allocation5 + $0x30] sm:$0xff]
    %v54 = vld [vmem:[#allocation5 + $0x38] sm:$0xff]
    %v55 = vld [vmem:[#allocation5 + $0x40] sm:$0xff]
    %v56 = vld [vmem:[#allocation5 + $0x48] sm:$0xff]
    %v57 = vld [vmem:[#allocation5 + $0x50] sm:$0xff]
    %v58 = vld [vmem:[#allocation5 + $0x58] sm:$0xff]
    %v59 = vld [vmem:[#allocation5 + $0x60] sm:$0xff]
    %v60 = vld [vmem:[#allocation5 + $0x68] sm:$0xff]
    %v61 = vld [vmem:[#allocation5 + $0x70] sm:$0xff]
    %v62 = vld [vmem:[#allocation5 + $0x78] sm:$0xff]
    %v63 = vld [vmem:[#allocation5 + $0x80] sm:$0xff]
    %v64 = vld [vmem:[#allocation5 + $0x88] sm:$0xff]
    %v65 = vld [vmem:[#allocation5 + $0x90] sm:$0xff]
    %v66 = vld [vmem:[#allocation5 + $0x98] sm:$0xff]
    %v67 = vld [vmem:[#allocation5 + $0xa0] sm:$0xff]
    %v68 = vld [vmem:[#allocation5 + $0xa8] sm:$0xff]
    %v69 = vld [vmem:[#allocation5 + $0xb0] sm:$0xff]
    %v70 = vld [vmem:[#allocation5 + $0xb8] sm:$0xff]
    %v71 = vld [vmem:[#allocation5 + $0xc0] sm:$0xff]
    %v72 = vld [vmem:[#allocation5 + $0xc8] sm:$0xff]
    %v73 = vld [vmem:[#allocation5 + $0xd0] sm:$0xff]
    %v74 = vld [vmem:[#allocation5 + $0xd8] sm:$0xff]
    %v75 = vld [vmem:[#allocation5 + $0xe0] sm:$0xff]
    %v76 = vld [vmem:[#allocation5 + $0xe8] sm:$0xff]
    %v77 = vld [vmem:[#allocation5 + $0xf0] sm:$0xff]
    %v78 = vld [vmem:[#allocation5 + $0xf8] sm:$0xff]
    %v79 = vld [vmem:[%s2] sm:$0x1]
    %v81 = vlaneseq
    %v82 = vshrl.u32 %v81, 7
    %v83 = vsub.s32 0, %v82
    %v84 = vrot.slane %v79, %v83
    %86 = vmatprep.subr.mxu0 0.0
    %87 = vmatpush1.msra.mxu0 %v62
    %88 = vmatprep.subr.mxu0 0.0
    %89 = vmatpush1.msra.mxu0 %v61
    %90 = vmatprep.subr.mxu0 0.0
    %91 = vmatpush1.msra.mxu0 %v60
    %92 = vmatprep.subr.mxu0 0.0
    %93 = vmatpush1.msra.mxu0 %v59
    %94 = vmatprep.subr.mxu0 0.0
    %95 = vmatpush1.msra.mxu0 %v58
    %96 = vmatprep.subr.mxu0 0.0
    %97 = vmatpush1.msra.mxu0 %v57
    %98 = vmatprep.subr.mxu0 0.0
    %99 = vmatpush1.msra.mxu0 %v56
    %100 = vmatprep.subr.mxu0 0.0
    %101 = vmatpush1.msra.mxu0 %v55
    %102 = vmatprep.subr.mxu0 0.0
    %103 = vmatpush1.msra.mxu0 %v54
    %104 = vmatprep.subr.mxu0 0.0
    %105 = vmatpush1.msra.mxu0 %v53
    %106 = vmatprep.subr.mxu0 0.0
    %107 = vmatpush1.msra.mxu0 %v52
    %108 = vmatprep.subr.mxu0 0.0
    %109 = vmatpush1.msra.mxu0 %v51
    %110 = vmatprep.subr.mxu0 0.0
    %111 = vmatpush1.msra.mxu0 %v50
    %112 = vmatprep.subr.mxu0 0.0
    %113 = vmatpush1.msra.mxu0 %v49
    %114 = vmatprep.subr.mxu0 0.0
    %115 = vmatpush1.msra.mxu0 %v48
    %116 = vmatprep.subr.mxu0 0.0
    %117 = vmatpush1.msra.mxu0 %v47
    %118 = vmatprep.subr.mxu0 0.0
    %119 = vmatpush2.msra.mxu0 %v78
    %120 = vmatprep.subr.mxu0 0.0
    %121 = vmatpush2.msra.mxu0 %v77
    %122 = vmatprep.subr.mxu0 0.0
    %123 = vmatpush2.msra.mxu0 %v76
    %124 = vmatprep.subr.mxu0 0.0
    %125 = vmatpush2.msra.mxu0 %v75
    %126 = vmatprep.subr.mxu0 0.0
    %127 = vmatpush2.msra.mxu0 %v74
    %128 = vmatprep.subr.mxu0 0.0
    %129 = vmatpush2.msra.mxu0 %v73
    %130 = vmatprep.subr.mxu0 0.0
    %131 = vmatpush2.msra.mxu0 %v72
    %132 = vmatprep.subr.mxu0 0.0
    %133 = vmatpush2.msra.mxu0 %v71
    %134 = vmatprep.subr.mxu0 0.0
    %135 = vmatpush2.msra.mxu0 %v70
    %136 = vmatprep.subr.mxu0 0.0
    %137 = vmatpush2.msra.mxu0 %v69
    %138 = vmatprep.subr.mxu0 0.0
    %139 = vmatpush2.msra.mxu0 %v68
    %140 = vmatprep.subr.mxu0 0.0
    %141 = vmatpush2.msra.mxu0 %v67
    %142 = vmatprep.subr.mxu0 0.0
    %143 = vmatpush2.msra.mxu0 %v66
    %144 = vmatprep.subr.mxu0 0.0
    %145 = vmatpush2.msra.mxu0 %v65
    %146 = vmatprep.subr.mxu0 0.0
    %147 = vmatpush2.msra.mxu0 %v64
    %148 = vmatprep.subr.mxu0 0.0
    %149 = vmatpush2.msra.mxu0 %v63
    %150 = vmatprep.mubr.f32.mxu0 %v44
    %151 = vmatmul.mubr.f32.gmra.mxu0 %v43
    %v152 = vpop.f32.mrf.mxu0
    %v153 = vadd.f32 %v84, %v152
    %v154 = vpop.f32.mrf.mxu0
    %155 = vmatprep.mubr.f32.mxu0 %v46
    %156 = vmatmul.mubr.f32.gmra.mxu0 %v45
    %v157 = vpop.f32.mrf.mxu0
    %v158 = vadd.f32 %v84, %v157
    %v159 = vpop.f32.mrf.mxu0
    %160 = vdwg.mxu0
    %161 = vst [vmem:[#allocation7] sm:$0xff] %v153
    %162 = vst [vmem:[#allocation7 + $0x8] sm:$0xff] %v158
    // Predicated region
    $region22: #{tpu_custom_call.1} parent=1 // pred_check
      _
    $region23: #{tpu_custom_call.1} parent=1 // pred_check_branch
      %164 = sbr.rel (0) target = $region25
    $region24: #{tpu_custom_call.1} parent=1 // pred_region
      %s166 = ssub.s32 256, 256
      %167 = vsyncadd [#allocation4], %s166
      %s168 = sshll.u32 [#allocation7], 4
      %s169 = int_to_ptr.vmem [resolvable:$true] %s168
      %174 = dma.vmem_to_hbm [thread:$0]  %s169, 256, %s3, [#allocation4], 128, 128, 8
    $region25: #{tpu_custom_call.1} parent=1 // pred_fallthru
      _
    // Predicated region
    $region26: #{tpu_custom_call.1} parent=1 // pred_check
      _
    $region27: #{tpu_custom_call.1} parent=1 // pred_check_branch
      %176 = sbr.rel (0) target = $region29
    $region28: #{tpu_custom_call.1} parent=1 // pred_region
      %177 = dma.done [#allocation4], 256
    $region29: #{tpu_custom_call.1} parent=1 // pred_fallthru
      _
    %178 = vsyncpa [#allocation3], 1
    %179 = vsyncpa [#allocation6], 1
    %180 = vsyncpa [#allocation4], 1

</llo_original>
